<compile_context>
chip_gen: v5e
topology: v5e:2x2
jax: 0.10.0
libtpu: 0.0.40
codegen_flags: <defaults>
</compile_context>

<pallas_src>
import jax
import jax.numpy as jnp
from jax.experimental import pallas as pl
from jax.experimental.pallas import tpu as pltpu

# Deterministic parameters of the synthetic loss_fn (additive-margin head).
_MARGIN = 0.2
_SCALE = 30.0


def _loss_kernel(n_ref, x_ref, t_ref, w_ref, num_ref, den_ref):
    i = pl.program_id(0)

    x = x_ref[...].astype(jnp.float32)        # (tile_n, c)
    t = t_ref[...]                            # (tile_n, 1) int32
    w = w_ref[...]                            # (1, c) float32
    tile_n, c = x.shape

    # Bool target mask — no float one_hot is materialized.
    class_ids = jax.lax.broadcasted_iota(jnp.int32, (tile_n, c), 1)
    mask = class_ids == t

    # Additive-margin scaled logits: preds = SCALE * (x - MARGIN * one_hot).
    sx = _SCALE * x
    preds = jnp.where(mask, sx - _SCALE * _MARGIN, sx)

    # Row-wise stable logsumexp (exp on EUP, reductions on XLU).
    m = jnp.max(preds, axis=1, keepdims=True)
    lse = m + jnp.log(jnp.sum(jnp.exp(preds - m), axis=1, keepdims=True))

    # Per-row gathers of the target logit / target class weight.
    pred_t = jnp.sum(jnp.where(mask, preds, 0.0), axis=1, keepdims=True)
    w_t = jnp.sum(jnp.where(mask, w, 0.0), axis=1, keepdims=True)

    # Ragged last block: mask the FULL contribution so undefined tail rows
    # (which may hold inf/NaN) cannot reach the sums (0 * inf = NaN otherwise).
    row_ids = i * tile_n + jax.lax.broadcasted_iota(jnp.int32, (tile_n, 1), 0)
    valid = row_ids < n_ref[0]

    # KL(one_hot || softmax) per row == lse - preds[target].
    num_val = jnp.sum(jnp.where(valid, w_t * (lse - pred_t), 0.0))
    den_val = jnp.sum(jnp.where(valid, w_t, 0.0))

    num_ref[...] = jnp.reshape(num_val, (1, 1, 1))
    den_ref[...] = jnp.reshape(den_val, (1, 1, 1))


def _budgets():
    """Generation-aware (tile_budget_bytes, vmem_limit_bytes)."""
    try:
        cap = pltpu.get_tpu_info().vmem_capacity_bytes
    except Exception:
        cap = 64 << 20  # be conservative (v7x-sized) if the query is unavailable
    if cap >= (96 << 20):          # v5e / v6e: 128 MiB physical VMEM
        return 48 << 20, 64 << 20
    return 24 << 20, 32 << 20      # v7x: 64 MiB physical VMEM


def log_softmax_wrapper_weighted(outputs, targets, weight, *, tile_n=None):
    """outputs: (N, 1, C), targets: (N, 1) int, weight: (C,) -> scalar f32 loss."""
    x = jnp.squeeze(outputs, axis=1)                      # (N, C), original dtype
    t = jnp.squeeze(targets, axis=1).astype(jnp.int32)    # (N,)
    n, c = x.shape

    weight2d = weight.astype(jnp.float32).reshape(1, c)
    t2d = t.reshape(n, 1)
    n_arr = jnp.array([n], dtype=jnp.int32)               # SMEM scalar (no recompile per N)

    # --- Tile rows against a generation-aware VMEM budget. ---
    budget, vmem_limit = _budgets()
    itemsize = jnp.dtype(x.dtype).itemsize
    # Double-buffered x tile + double-buffered (lane-padded) targets tile.
    per_row = 2 * c * itemsize + 2 * 128 * 4
    if tile_n is None:
        tile_n = min(4096, budget // per_row)
    tile_n = max(8, (int(tile_n) // 8) * 8)
    tile_n = min(tile_n, max(8, ((n + 7) // 8) * 8))      # don't exceed (rounded) N

    n_blocks = -(-n // tile_n)

    num, den = pl.pallas_call(
        _loss_kernel,
        out_shape=(jax.ShapeDtypeStruct((n_blocks, 1, 1), jnp.float32),
                   jax.ShapeDtypeStruct((n_blocks, 1, 1), jnp.float32)),
        grid_spec=pltpu.PrefetchScalarGridSpec(
            num_scalar_prefetch=1,
            grid=(n_blocks,),
            in_specs=[
                pl.BlockSpec((tile_n, c), lambda i, n_ref: (i, 0)),   # logits tile (full C)
                pl.BlockSpec((tile_n, 1), lambda i, n_ref: (i, 0)),   # targets tile
                pl.BlockSpec((1, c), lambda i, n_ref: (0, 0)),        # weight row (resident)
            ],
            out_specs=(
                pl.BlockSpec((1, 1, 1), lambda i, n_ref: (i, 0, 0)),  # per-block num
                pl.BlockSpec((1, 1, 1), lambda i, n_ref: (i, 0, 0)),  # per-block den
            ),
        ),
        compiler_params=pltpu.CompilerParams(
            dimension_semantics=("parallel",),   # blocks are independent -> megacore on v7x
            vmem_limit_bytes=vmem_limit),
    )(n_arr, x, t2d, weight2d)

    # Tiny cross-block reduction + single exact divide in the wrapper.
    # NOTE: den == 0 (all selected class weights zero) yields NaN, matching PyTorch.
    return jnp.sum(num) / jnp.sum(den)


def _reference(outputs, targets, weight):
    """Pure-JAX reference mirroring the PyTorch forward exactly."""
    x = jnp.squeeze(outputs, axis=1).astype(jnp.float32)
    t = jnp.squeeze(targets, axis=1).astype(jnp.int32)
    n, c = x.shape
    one_hot = jax.nn.one_hot(t, c, dtype=jnp.float32)
    preds = _SCALE * (x - _MARGIN * one_hot)
    logp = jax.nn.log_softmax(preds, axis=1)
    loss_mat = jnp.where(one_hot > 0.0,
                         one_hot * (jnp.log(jnp.maximum(one_hot, 1e-30)) - logp),
                         0.0)
    weight_mat = one_hot * weight.astype(jnp.float32).reshape(1, c)
    return jnp.sum(loss_mat * weight_mat) / jnp.sum(weight_mat)


if __name__ == "__main__":
    key = jax.random.PRNGKey(0)

    # Case 1: small shapes, single block, C not a multiple of 128 (no padding copies).
    k1, k2 = jax.random.split(key)
    N, C = 8, 16
    outputs = jax.random.normal(k1, (N, 1, C), dtype=jnp.float32)
    targets = jax.random.randint(k2, (N, 1), 0, C, dtype=jnp.int32)
    weight = 0.5 + jnp.arange(C, dtype=jnp.float32) / C
    loss = jax.block_until_ready(log_softmax_wrapper_weighted(outputs, targets, weight))
    ref = jax.block_until_ready(_reference(outputs, targets, weight))
    assert jnp.allclose(loss, ref, rtol=1e-5, atol=1e-5), (loss, ref)

    # Case 2: multi-block grid with a ragged last block (row masking) and
    # per-block partial outputs summed in the wrapper.
    k3, k4 = jax.random.split(k1)
    N2, C2 = 20, 200
    outputs2 = jax.random.normal(k3, (N2, 1, C2), dtype=jnp.float32)
    targets2 = jax.random.randint(k4, (N2, 1), 0, C2, dtype=jnp.int32)
    weight2 = 0.5 + jnp.arange(C2, dtype=jnp.float32) / C2
    loss2 = jax.block_until_ready(
        log_softmax_wrapper_weighted(outputs2, targets2, weight2, tile_n=8))
    ref2 = jax.block_until_ready(_reference(outputs2, targets2, weight2))
    assert jnp.allclose(loss2, ref2, rtol=1e-5, atol=1e-5), (loss2, ref2)

    # Case 3: bf16 logits — original dtype is streamed, cast happens in-kernel.
    k5, k6 = jax.random.split(k3)
    N3, C3 = 24, 96
    outputs3 = jax.random.normal(k5, (N3, 1, C3), dtype=jnp.bfloat16)
    targets3 = jax.random.randint(k6, (N3, 1), 0, C3, dtype=jnp.int32)
    weight3 = 0.5 + jnp.arange(C3, dtype=jnp.float32) / C3
    loss3 = jax.block_until_ready(log_softmax_wrapper_weighted(outputs3, targets3, weight3))
    ref3 = jax.block_until_ready(_reference(outputs3, targets3, weight3))
    assert jnp.allclose(loss3, ref3, rtol=1e-4, atol=1e-4), (loss3, ref3)

    # TODO(synk): the PyTorch module accepts an arbitrary `loss_fn`; a deterministic
    # additive-margin scaled head is baked in here (same as the reference).
    print("KERNEL_OK")
</pallas_src>

<mosaic_0001>
module attributes {stable_mosaic.version = 11 : i64} {
  func.func @_loss_kernel(%arg0: i32, %arg1: memref<1xi32, #tpu.memory_space<smem>>, %arg2: memref<8x16xf32, #tpu.memory_space<vmem>>, %arg3: memref<8x1xi32, #tpu.memory_space<vmem>>, %arg4: memref<1x16xf32, #tpu.memory_space<vmem>>, %arg5: memref<1x1x1xf32, #tpu.memory_space<vmem>>, %arg6: memref<1x1x1xf32, #tpu.memory_space<vmem>>) attributes {dimension_semantics = [#tpu.dimension_semantics<parallel>], iteration_bounds = array<i64: 1>, scalar_prefetch = 1 : i64, scratch_operands = 0 : i64, tpu.core_type = #tpu.core_type<tc>, window_params = [{transform_indices = @transform_0, window_bounds = array<i64: 8, 16>}, {transform_indices = @transform_1, window_bounds = array<i64: 8, 1>}, {pipeline_mode = #tpu.pipeline_mode<synchronous>, transform_indices = @transform_2, window_bounds = array<i64: 1, 16>}, {transform_indices = @transform_3, window_bounds = array<i64: 1, 1, 1>}, {transform_indices = @transform_4, window_bounds = array<i64: 1, 1, 1>}]} {
    %c0 = arith.constant 0 : index
    %c0_0 = arith.constant 0 : index
    %0 = vector.load %arg2[%c0, %c0_0] : memref<8x16xf32, #tpu.memory_space<vmem>>, vector<8x16xf32>
    %c0_1 = arith.constant 0 : index
    %c0_2 = arith.constant 0 : index
    %1 = vector.load %arg3[%c0_1, %c0_2] : memref<8x1xi32, #tpu.memory_space<vmem>>, vector<8x1xi32>
    %c0_3 = arith.constant 0 : index
    %c0_4 = arith.constant 0 : index
    %2 = vector.load %arg4[%c0_3, %c0_4] : memref<1x16xf32, #tpu.memory_space<vmem>>, vector<1x16xf32>
    %3 = tpu.iota {dimensions = array<i32: 1>} : vector<8x16xi32>
    %4 = vector.broadcast %1 : vector<8x1xi32> to vector<8x16xi32>
    %5 = arith.cmpi eq, %3, %4 : vector<8x16xi32>
    %cst = arith.constant 3.000000e+01 : f32
    %6 = vector.broadcast %cst : f32 to vector<8x16xf32>
    %7 = arith.mulf %6, %0 : vector<8x16xf32>
    %cst_5 = arith.constant 6.000000e+00 : f32
    %8 = vector.broadcast %cst_5 : f32 to vector<8x16xf32>
    %9 = arith.subf %7, %8 : vector<8x16xf32>
    %10 = arith.select %5, %9, %7 : vector<8x16xi1>, vector<8x16xf32>
    %cst_6 = arith.constant dense<0xFF800000> : vector<8xf32>
    %11 = vector.multi_reduction <maximumf>, %10, %cst_6 [1] : vector<8x16xf32> to vector<8xf32>
    %12 = vector.shape_cast %11 : vector<8xf32> to vector<8x1xf32>
    %13 = vector.broadcast %12 : vector<8x1xf32> to vector<8x16xf32>
    %14 = arith.subf %10, %13 : vector<8x16xf32>
    %15 = math.exp %14 : vector<8x16xf32>
    %cst_7 = arith.constant dense<0.000000e+00> : vector<8xf32>
    %16 = vector.multi_reduction <add>, %15, %cst_7 [1] : vector<8x16xf32> to vector<8xf32>
    %17 = vector.shape_cast %16 : vector<8xf32> to vector<8x1xf32>
    %18 = math.log %17 : vector<8x1xf32>
    %19 = arith.addf %12, %18 : vector<8x1xf32>
    %cst_8 = arith.constant 0.000000e+00 : f32
    %20 = vector.broadcast %cst_8 : f32 to vector<8x16xf32>
    %21 = arith.select %5, %10, %20 : vector<8x16xi1>, vector<8x16xf32>
    %cst_9 = arith.constant dense<0.000000e+00> : vector<8xf32>
    %22 = vector.multi_reduction <add>, %21, %cst_9 [1] : vector<8x16xf32> to vector<8xf32>
    %23 = vector.shape_cast %22 : vector<8xf32> to vector<8x1xf32>
    %cst_10 = arith.constant 0.000000e+00 : f32
    %24 = vector.shape_cast %2 : vector<1x16xf32> to vector<1x16xf32>
    %25 = vector.broadcast %24 : vector<1x16xf32> to vector<8x16xf32>
    %26 = vector.broadcast %cst_10 : f32 to vector<8x16xf32>
    %27 = arith.select %5, %25, %26 : vector<8x16xi1>, vector<8x16xf32>
    %cst_11 = arith.constant dense<0.000000e+00> : vector<8xf32>
    %28 = vector.multi_reduction <add>, %27, %cst_11 [1] : vector<8x16xf32> to vector<8xf32>
    %29 = vector.shape_cast %28 : vector<8xf32> to vector<8x1xf32>
    %c8_i32 = arith.constant 8 : i32
    %30 = arith.muli %arg0, %c8_i32 : i32
    %31 = tpu.iota {dimensions = array<i32: 0>} : vector<8x1xi32>
    %32 = vector.broadcast %30 : i32 to vector<8x1xi32>
    %33 = arith.addi %32, %31 : vector<8x1xi32>
    %c0_12 = arith.constant 0 : index
    %34 = memref.load %arg1[%c0_12] : memref<1xi32, #tpu.memory_space<smem>>
    %35 = vector.broadcast %34 : i32 to vector<8x1xi32>
    %36 = arith.cmpi slt, %33, %35 : vector<8x1xi32>
    %37 = arith.subf %19, %23 : vector<8x1xf32>
    %38 = arith.mulf %29, %37 : vector<8x1xf32>
    %cst_13 = arith.constant 0.000000e+00 : f32
    %39 = vector.broadcast %cst_13 : f32 to vector<8x1xf32>
    %40 = arith.select %36, %38, %39 : vector<8x1xi1>, vector<8x1xf32>
    %41 = vector.shape_cast %40 : vector<8x1xf32> to vector<1x8x1xf32>
    %cst_14 = arith.constant dense<0.000000e+00> : vector<1xf32>
    %42 = vector.multi_reduction <add>, %41, %cst_14 [1, 2] : vector<1x8x1xf32> to vector<1xf32>
    %43 = vector.shape_cast %42 : vector<1xf32> to vector<1x1x1xf32>
    %44 = vector.extract %43[0, 0, 0] : f32 from vector<1x1x1xf32>
    %cst_15 = arith.constant 0.000000e+00 : f32
    %45 = vector.broadcast %cst_15 : f32 to vector<8x1xf32>
    %46 = arith.select %36, %29, %45 : vector<8x1xi1>, vector<8x1xf32>
    %47 = vector.shape_cast %46 : vector<8x1xf32> to vector<1x8x1xf32>
    %cst_16 = arith.constant dense<0.000000e+00> : vector<1xf32>
    %48 = vector.multi_reduction <add>, %47, %cst_16 [1, 2] : vector<1x8x1xf32> to vector<1xf32>
    %49 = vector.shape_cast %48 : vector<1xf32> to vector<1x1x1xf32>
    %50 = vector.extract %49[0, 0, 0] : f32 from vector<1x1x1xf32>
    %51 = vector.broadcast %44 : f32 to vector<1x1x1xf32>
    %c0_17 = arith.constant 0 : index
    %c0_18 = arith.constant 0 : index
    %c0_19 = arith.constant 0 : index
    %52 = vector.load %arg5[%c0_17, %c0_18, %c0_19] : memref<1x1x1xf32, #tpu.memory_space<vmem>>, vector<1x1x1xf32>
    tpu.vector_store %arg5[%c0_17, %c0_18, %c0_19], %51 {strides = array<i32>} : memref<1x1x1xf32, #tpu.memory_space<vmem>>, vector<1x1x1xf32>,
    %53 = vector.broadcast %50 : f32 to vector<1x1x1xf32>
    %c0_20 = arith.constant 0 : index
    %c0_21 = arith.constant 0 : index
    %c0_22 = arith.constant 0 : index
    %54 = vector.load %arg6[%c0_20, %c0_21, %c0_22] : memref<1x1x1xf32, #tpu.memory_space<vmem>>, vector<1x1x1xf32>
    tpu.vector_store %arg6[%c0_20, %c0_21, %c0_22], %53 {strides = array<i32>} : memref<1x1x1xf32, #tpu.memory_space<vmem>>, vector<1x1x1xf32>,
    return
  }
  func.func @transform_0(%arg0: i32, %arg1: memref<1xi32, #tpu.memory_space<smem>>) -> (i32, i32) {
    %c0_i32 = arith.constant 0 : i32
    %c0_i32_0 = arith.constant 0 : i32
    return %arg0, %c0_i32 : i32, i32
  }
  func.func @transform_1(%arg0: i32, %arg1: memref<1xi32, #tpu.memory_space<smem>>) -> (i32, i32) {
    %c0_i32 = arith.constant 0 : i32
    %c0_i32_0 = arith.constant 0 : i32
    return %arg0, %c0_i32 : i32, i32
  }
  func.func @transform_2(%arg0: i32, %arg1: memref<1xi32, #tpu.memory_space<smem>>) -> (i32, i32) {
    %c0_i32 = arith.constant 0 : i32
    %c0_i32_0 = arith.constant 0 : i32
    %c0_i32_1 = arith.constant 0 : i32
    return %c0_i32, %c0_i32_0 : i32, i32
  }
  func.func @transform_3(%arg0: i32, %arg1: memref<1xi32, #tpu.memory_space<smem>>) -> (i32, i32, i32) {
    %c0_i32 = arith.constant 0 : i32
    %c0_i32_0 = arith.constant 0 : i32
    %c0_i32_1 = arith.constant 0 : i32
    return %arg0, %c0_i32, %c0_i32_0 : i32, i32, i32
  }
  func.func @transform_4(%arg0: i32, %arg1: memref<1xi32, #tpu.memory_space<smem>>) -> (i32, i32, i32) {
    %c0_i32 = arith.constant 0 : i32
    %c0_i32_0 = arith.constant 0 : i32
    %c0_i32_1 = arith.constant 0 : i32
    return %arg0, %c0_i32, %c0_i32_0 : i32, i32, i32
  }
}

</mosaic_0001>

<llo_original>
// kernel: tpu_custom_call.1
$region0: #{tpu_custom_call.1}
  #allocation0 [shape = 'u32[]', space=smem, size = 0x4, offset = 0x4, fixed_abs, tag = 'smem constant byte address 0x4 - core index']
  #allocation1 [shape = 'u32[72,128]{1,0:T(1,128)}', space=vmem, size = 0x9000, scoped, tag = 'internal scratch']
  #allocation2 [shape = 's32[1]{0}', space=sflag, size = 0x4, scoped, tag = 'scoped memory for tpu_custom_call.1']
  #allocation3 [shape = 's32[1]{0:T(128)S(6)}', space=smem, size = 0x200, scoped, tag = 'prefetched SMEM operand 0']
  %s0 = inlined_call_operand.<no memory space> [shape: s32[1], index: 0, kind: input, shape index: {}]
  %s1 = inlined_call_operand.vmem [shape: f32[8,16], index: 1, kind: input, shape index: {}]
  %s2 = inlined_call_operand.vmem [shape: s32[8,1], index: 2, kind: input, shape index: {}]
  %s3 = inlined_call_operand.vmem [shape: f32[1,16], index: 3, kind: input, shape index: {}]
  %s4 = inlined_call_operand.hbm [shape: f32[1,1,1], index: 4, kind: output, shape index: {0}]
  %s5 = inlined_call_operand.hbm [shape: f32[1,1,1], index: 5, kind: output, shape index: {1}]
  %6 = xla_tuple %s4, %s5
  %s7 = sld [smem:[#allocation0]]
  $region30: #{tpu_custom_call.1} parent=0
    _
  %s9 = ssub.s32 1, %s7
  %s10 = scalar_select 0, %s9, %s7
  %11 = sst [smem:[#allocation3]] %s0
  $region1: #{tpu_custom_call.1} parent=0
    #allocation4 [shape = 'u8[512]{0}', space=vmem, size = 0x400, scoped, tag = 'output window, operand 0, single buffered']
    #allocation5 [shape = 's32[1]{0}', space=sflag, size = 0x4, scoped, tag = 'scoped memory for tpu_custom_call.1']
    #allocation6 [shape = 'u8[512]{0}', space=vmem, size = 0x400, scoped, tag = 'output window, operand 1, single buffered']
    #allocation7 [shape = 's32[1]{0}', space=sflag, size = 0x4, scoped, tag = 'scoped memory for tpu_custom_call.1']
    %12 = vsyncpa [#allocation5], 0
    %13 = vsyncpa [#allocation7], 0
    // Predicated region
    $region2: #{tpu_custom_call.1} parent=1 // pred_check
      _
    $region3: #{tpu_custom_call.1} parent=1 // pred_check_branch
      %15 = sbr.rel (0) target = $region5
    $region4: #{tpu_custom_call.1} parent=1 // pred_region
      _
    $region5: #{tpu_custom_call.1} parent=1 // pred_fallthru
      _
    // Predicated region
    $region6: #{tpu_custom_call.1} parent=1 // pred_check
      _
    $region7: #{tpu_custom_call.1} parent=1 // pred_check_branch
      %17 = sbr.rel (0) target = $region9
    $region8: #{tpu_custom_call.1} parent=1 // pred_region
      _
    $region9: #{tpu_custom_call.1} parent=1 // pred_fallthru
      _
    // Predicated region
    $region10: #{tpu_custom_call.1} parent=1 // pred_check
      _
    $region11: #{tpu_custom_call.1} parent=1 // pred_check_branch
      %19 = sbr.rel (0) target = $region13
    $region12: #{tpu_custom_call.1} parent=1 // pred_region
      _
    $region13: #{tpu_custom_call.1} parent=1 // pred_fallthru
      _
    %v20 = vld [vmem:[%s1] sm:$0xff]
    %v21 = vld [vmem:[%s2] sm:$0xff]
    %v22 = vld [vmem:[%s3] sm:$0x1]
    %v23 = vlaneseq
    %v24 = vand.u32 %v23, 127
    %25 = vset.pattern.permute.xlu0 0
    %26 = vperm.xlu0 %25, %v21
    %v27 = vpop.permute.xlu0 %26
    %vm28 = vcmp.eq.s32.totalorder %v24, %v27
    %v29 = vmul.f32 %v20, 30.0
    %v30 = vsub.f32 %v29, 6.0
    %v31 = vsel %vm28, %v30, %v29
    %vm32 = vcmask 130048
    %v33 = vsel %vm32, %v31, -inf
    %34 = vmax.xlane.f32.xlu0 %v33
    %v35 = vpop.xlane.xlu0 %34
    %v36 = vsub.f32 %v31, %v35
    %v37 = vmul.f32 %v36, 1.442695
    %v38 = vpow.pop %v37
    %v39 = vsel %vm32, %v38, 0.0
    %40 = vadd.xlane.f32.xlu0 %v39
    %v41 = vpop.xlane.xlu0 %40
    %v42 = vlog2.pop %v41
    %v43 = vmul.f32 %v42, 0.6931472
    %v44 = vadd.f32 %v35, %v43
    %v45 = vsel %vm28, %v30, 0.0
    %v46 = vsel %vm32, %v45, 0.0
    %47 = vadd.xlane.f32.xlu0 %v46
    %v48 = vpop.xlane.xlu0 %47
    %v50 = vperm.slane %v22, 0
    %v52 = vsel %vm28, %v50, 0.0
    %v53 = vsel %vm32, %v52, 0.0
    %54 = vadd.xlane.f32.xlu0 %v53
    %v55 = vpop.xlane.xlu0 %54
    %s56 = smul.u32 0, 8
    %v57 = vlaneseq
    %v58 = vshrl.u32 %v57, 7
    %v59 = vstv %s56
    %v60 = vadd.s32 %v59, %v58
    %s61 = sld [smem:[#allocation3]]
    %v62 = vstv %s61
    %vm63 = vcmp.lt.s32.totalorder %v60, %v62
    %v64 = vsub.f32 %v44, %v48
    %v65 = vmul.f32 %v55, %v64
    %v66 = vsel %vm63, %v65, 0.0
    %vm67 = vcmask 7168
    %v68 = vsel %vm67, %v66, 0.0
    %69 = vadd.xlane.f32.xlu0 %v68
    %v70 = vpop.xlane.xlu0 %69
    %v71 = vrot.slane %v70, 4
    %v72 = vadd.f32 %v70, %v71
    %v73 = vrot.slane %v72, 2
    %v74 = vadd.f32 %v72, %v73
    %v75 = vrot.slane %v74, 1
    %v76 = vadd.f32 %v74, %v75
    %s77 = vtos %v76
    %v78 = vsel %vm63, %v55, 0.0
    %v79 = vsel %vm67, %v78, 0.0
    %80 = vadd.xlane.f32.xlu0 %v79
    %v81 = vpop.xlane.xlu0 %80
    %v82 = vrot.slane %v81, 4
    %v83 = vadd.f32 %v81, %v82
    %v84 = vrot.slane %v83, 2
    %v85 = vadd.f32 %v83, %v84
    %v86 = vrot.slane %v85, 1
    %v87 = vadd.f32 %v85, %v86
    %s88 = vtos %v87
    %v89 = vstv %s77
    %vm90 = vcmask 0
    %91 = vst.msk [vmem:[#allocation4] sm:$0x1] %vm90, %v89
    %v92 = vstv %s88
    %93 = vst.msk [vmem:[#allocation6] sm:$0x1] %vm90, %v92
    // Predicated region
    $region14: #{tpu_custom_call.1} parent=1 // pred_check
      _
    $region15: #{tpu_custom_call.1} parent=1 // pred_check_branch
      %95 = sbr.rel (0) target = $region17
    $region16: #{tpu_custom_call.1} parent=1 // pred_region
      %97 = vsyncadd [#allocation5], 0
      %s99 = sshll.u32 [#allocation4], 4
      %s100 = int_to_ptr.vmem [resolvable:$true] %s99
      %s101 = sshll.u32 %s4, 4
      %s102 = int_to_ptr.hbm [resolvable:$true] %s101
      %104 = dma.vmem_to_hbm [thread:$0]  %s100, 16, %s102, [#allocation5]
    $region17: #{tpu_custom_call.1} parent=1 // pred_fallthru
      _
    // Predicated region
    $region18: #{tpu_custom_call.1} parent=1 // pred_check
      _
    $region19: #{tpu_custom_call.1} parent=1 // pred_check_branch
      %106 = sbr.rel (0) target = $region21
    $region20: #{tpu_custom_call.1} parent=1 // pred_region
      %108 = vsyncadd [#allocation7], 0
      %s110 = sshll.u32 [#allocation6], 4
      %s111 = int_to_ptr.vmem [resolvable:$true] %s110
      %s112 = sshll.u32 %s5, 4
      %s113 = int_to_ptr.hbm [resolvable:$true] %s112
      %115 = dma.vmem_to_hbm [thread:$0]  %s111, 16, %s113, [#allocation7]
    $region21: #{tpu_custom_call.1} parent=1 // pred_fallthru
      _
    // Predicated region
    $region22: #{tpu_custom_call.1} parent=1 // pred_check
      _
    $region23: #{tpu_custom_call.1} parent=1 // pred_check_branch
      %117 = sbr.rel (0) target = $region25
    $region24: #{tpu_custom_call.1} parent=1 // pred_region
      %119 = dma.done [#allocation5], 16
    $region25: #{tpu_custom_call.1} parent=1 // pred_fallthru
      _
    // Predicated region
    $region26: #{tpu_custom_call.1} parent=1 // pred_check
      _
    $region27: #{tpu_custom_call.1} parent=1 // pred_check_branch
      %121 = sbr.rel (0) target = $region29
    $region28: #{tpu_custom_call.1} parent=1 // pred_region
      %123 = dma.done [#allocation7], 16
    $region29: #{tpu_custom_call.1} parent=1 // pred_fallthru
      _
    %124 = vsyncpa [#allocation5], 1
    %125 = vsyncpa [#allocation7], 1

</llo_original>
